<compile_context>
chip_gen: v5e
topology: v5e:2x2
jax: 0.10.0
libtpu: 0.0.40
codegen_flags: <defaults>
</compile_context>

<pallas_src>
import functools

import jax
import jax.numpy as jnp
from jax.experimental import pallas as pl
from jax.experimental.pallas import tpu as pltpu


def _round_up(x: int, m: int) -> int:
    return ((x + m - 1) // m) * m


# ---------------------------------------------------------------------------
# Fused kernel: one M-tile of x -> (e1, e2, p1, p2) tiles.
# ---------------------------------------------------------------------------
def _fused_encoder_projector_kernel(
    x_ref,
    w_e1_ref, b_e1_ref,
    w_e2_ref, b_e2_ref,
    w_p1_ref, b_p1_ref,
    w_p2_ref, b_p2_ref,
    e1_ref, e2_ref, p1_ref, p2_ref,
):
    # Activations arrive in their native dtype; cast to bf16 once for the MXU.
    x = x_ref[...].astype(jnp.bfloat16)

    # ---- encoder 1 -> projector 1 (intermediate stays in VMEM) ----
    e1 = jnp.dot(x, w_e1_ref[...], preferred_element_type=jnp.float32)
    e1 = jnp.maximum(e1 + b_e1_ref[...], 0.0)
    e1_ref[...] = e1.astype(e1_ref.dtype)

    p1 = jnp.dot(e1.astype(jnp.bfloat16), w_p1_ref[...],
                 preferred_element_type=jnp.float32)
    p1 = jnp.maximum(p1 + b_p1_ref[...], 0.0)
    p1_ref[...] = p1.astype(p1_ref.dtype)

    # ---- encoder 2 -> projector 2 ----
    e2 = jnp.dot(x, w_e2_ref[...], preferred_element_type=jnp.float32)
    e2 = jnp.maximum(e2 + b_e2_ref[...], 0.0)
    e2_ref[...] = e2.astype(e2_ref.dtype)

    p2 = jnp.dot(e2.astype(jnp.bfloat16), w_p2_ref[...],
                 preferred_element_type=jnp.float32)
    p2 = jnp.maximum(p2 + b_p2_ref[...], 0.0)
    p2_ref[...] = p2.astype(p2_ref.dtype)


# ---------------------------------------------------------------------------
# Parameter init (PyTorch nn.Linear layout / init) + one-time preparation.
# ---------------------------------------------------------------------------
def init_encoder_projector_params(key, in_encoder_features, out_encoder_features,
                                  in_projector_features, out_projector_features,
                                  dtype=jnp.float32):
    """Mimics torch.nn.Linear's uniform(-1/sqrt(fan_in), 1/sqrt(fan_in)) init."""
    def linear_init(k, n_out, n_in):
        kw, kb = jax.random.split(k)
        bound = 1.0 / (n_in ** 0.5)
        w = jax.random.uniform(kw, (n_out, n_in), minval=-bound, maxval=bound,
                               dtype=dtype)
        b = jax.random.uniform(kb, (n_out,), minval=-bound, maxval=bound,
                               dtype=dtype)
        return w, b

    k1, k2, k3, k4 = jax.random.split(key, 4)
    params = {}
    params["enc1_w"], params["enc1_b"] = linear_init(
        k1, out_encoder_features, in_encoder_features)
    params["enc2_w"], params["enc2_b"] = linear_init(
        k2, out_encoder_features, in_encoder_features)
    params["proj1_w"], params["proj1_b"] = linear_init(
        k3, out_projector_features, in_projector_features)
    params["proj2_w"], params["proj2_b"] = linear_init(
        k4, out_projector_features, in_projector_features)
    return params


def prepare_params(params, weight_dtype=jnp.bfloat16):
    """One-time prep (do NOT call per forward):
       weights (N, K) -> zero-padded, transposed to (Kp, Np), cast to bf16;
       biases -> zero-padded (1, Np), kept f32."""
    def prep_w(w):
        n, k = w.shape
        kp, np_ = _round_up(k, 128), _round_up(n, 128)
        w = jnp.pad(w, ((0, np_ - n), (0, kp - k)))
        return jnp.asarray(w.T, dtype=weight_dtype)          # (Kp, Np)

    def prep_b(b):
        n = b.shape[0]
        np_ = _round_up(n, 128)
        return jnp.pad(b.astype(jnp.float32), (0, np_ - n)).reshape(1, np_)

    return {
        "w_e1": prep_w(params["enc1_w"]), "b_e1": prep_b(params["enc1_b"]),
        "w_e2": prep_w(params["enc2_w"]), "b_e2": prep_b(params["enc2_b"]),
        "w_p1": prep_w(params["proj1_w"]), "b_p1": prep_b(params["proj1_b"]),
        "w_p2": prep_w(params["proj2_w"]), "b_p2": prep_b(params["proj2_b"]),
    }


# ---------------------------------------------------------------------------
# Forward pass.
# ---------------------------------------------------------------------------
@functools.partial(jax.jit, static_argnames=("n_enc", "n_proj", "tm"))
def encoder_projector_forward(x, prepared, *, n_enc, n_proj, tm=256):
    *lead, K = x.shape
    Kp, N1p = prepared["w_e1"].shape        # padded in_encoder / out_encoder
    N1p_chk, N2p = prepared["w_p1"].shape   # padded in_projector / out_projector
    assert N1p == N1p_chk, "out_encoder_features must equal in_projector_features"
    assert K <= Kp and n_enc <= N1p and n_proj <= N2p

    # Weights must fit VMEM for the fused (no-reduction-loop) path.
    weight_bytes = 2 * (Kp * N1p + N1p * N2p) * prepared["w_e1"].dtype.itemsize
    assert weight_bytes < 8 * 1024 * 1024, (
        "fused path assumes resident weights; use a tiled per-layer kernel")

    x2d = x.reshape(-1, K)
    M = x2d.shape[0]
    tm_eff = min(tm, _round_up(M, 8))       # multiple of 8; single tile if M small
    Mp = _round_up(M, tm_eff)
    if (Mp, Kp) != (M, K):
        x2d = jnp.pad(x2d, ((0, Mp - M), (0, Kp - K)))

    grid = (Mp // tm_eff,)                  # 1-D grid over M only ("parallel";
                                            # shards across v7x's 2 TCs when >1 tile)

    out_shape = (
        jax.ShapeDtypeStruct((Mp, N1p), x.dtype),   # encoded_1
        jax.ShapeDtypeStruct((Mp, N1p), x.dtype),   # encoded_2
        jax.ShapeDtypeStruct((Mp, N2p), x.dtype),   # projected_1
        jax.ShapeDtypeStruct((Mp, N2p), x.dtype),   # projected_2
    )

    in_specs = [
        pl.BlockSpec((tm_eff, Kp), lambda i: (i, 0)),   # x tile (streamed)
        pl.BlockSpec((Kp, N1p), lambda i: (0, 0)),      # W_e1 (resident)
        pl.BlockSpec((1, N1p), lambda i: (0, 0)),       # b_e1
        pl.BlockSpec((Kp, N1p), lambda i: (0, 0)),      # W_e2
        pl.BlockSpec((1, N1p), lambda i: (0, 0)),       # b_e2
        pl.BlockSpec((N1p, N2p), lambda i: (0, 0)),     # W_p1
        pl.BlockSpec((1, N2p), lambda i: (0, 0)),       # b_p1
        pl.BlockSpec((N1p, N2p), lambda i: (0, 0)),     # W_p2
        pl.BlockSpec((1, N2p), lambda i: (0, 0)),       # b_p2
    ]
    out_specs = [
        pl.BlockSpec((tm_eff, N1p), lambda i: (i, 0)),
        pl.BlockSpec((tm_eff, N1p), lambda i: (i, 0)),
        pl.BlockSpec((tm_eff, N2p), lambda i: (i, 0)),
        pl.BlockSpec((tm_eff, N2p), lambda i: (i, 0)),
    ]

    e1, e2, p1, p2 = pl.pallas_call(
        _fused_encoder_projector_kernel,
        out_shape=out_shape,
        grid_spec=pltpu.PrefetchScalarGridSpec(
            num_scalar_prefetch=0,
            grid=grid,
            in_specs=in_specs,
            out_specs=out_specs,
        ),
        compiler_params=pltpu.CompilerParams(
            dimension_semantics=("parallel",),
        ),
    )(x2d,
      prepared["w_e1"], prepared["b_e1"],
      prepared["w_e2"], prepared["b_e2"],
      prepared["w_p1"], prepared["b_p1"],
      prepared["w_p2"], prepared["b_p2"])

    e1 = e1[:M, :n_enc].reshape(*lead, n_enc)
    e2 = e2[:M, :n_enc].reshape(*lead, n_enc)
    p1 = p1[:M, :n_proj].reshape(*lead, n_proj)
    p2 = p2[:M, :n_proj].reshape(*lead, n_proj)
    return e1, e2, p1, p2


# ---------------------------------------------------------------------------
# Plain-JAX reference mirroring the kernel math (bf16 operands, f32 acc/bias).
# ---------------------------------------------------------------------------
def _ref_linear_relu(x, w, b):
    y = jnp.einsum("...k,nk->...n",
                   x.astype(jnp.bfloat16), w.astype(jnp.bfloat16),
                   preferred_element_type=jnp.float32)
    return jnp.maximum(y + b.astype(jnp.float32), 0.0)


if __name__ == "__main__":
    # Small, module-consistent shapes: x is [batch, seq, in_encoder_features].
    in_encoder_features = 32
    out_encoder_features = 64      # == in_projector_features
    in_projector_features = 64
    out_projector_features = 128
    batch, seq = 2, 8

    key = jax.random.PRNGKey(0)
    kx, kp = jax.random.split(key)
    x = jax.random.normal(kx, (batch, seq, in_encoder_features), dtype=jnp.float32)

    params = init_encoder_projector_params(
        kp, in_encoder_features, out_encoder_features,
        in_projector_features, out_projector_features)
    prepared = prepare_params(params)          # one-time: pad + (K,N) + bf16
    prepared = jax.block_until_ready(prepared)

    outs = encoder_projector_forward(
        x, prepared, n_enc=out_encoder_features, n_proj=out_projector_features)
    jax.block_until_ready(outs)
    encoded_1, encoded_2, projected_1, projected_2 = outs

    # Reference check (same bf16-operand / f32-accumulate math in plain JAX).
    ref_e1 = _ref_linear_relu(x, params["enc1_w"], params["enc1_b"])
    ref_e2 = _ref_linear_relu(x, params["enc2_w"], params["enc2_b"])
    ref_p1 = _ref_linear_relu(ref_e1, params["proj1_w"], params["proj1_b"])
    ref_p2 = _ref_linear_relu(ref_e2, params["proj2_w"], params["proj2_b"])

    assert encoded_1.shape == (batch, seq, out_encoder_features)
    assert encoded_2.shape == (batch, seq, out_encoder_features)
    assert projected_1.shape == (batch, seq, out_projector_features)
    assert projected_2.shape == (batch, seq, out_projector_features)

    for got, ref in ((encoded_1, ref_e1), (encoded_2, ref_e2),
                     (projected_1, ref_p1), (projected_2, ref_p2)):
        assert got.dtype == x.dtype
        err = float(jnp.max(jnp.abs(got.astype(jnp.float32) - ref)))
        assert jnp.allclose(got.astype(jnp.float32), ref, atol=1e-2, rtol=1e-2), err

    print("KERNEL_OK")
</pallas_src>

<mosaic_0001>
module attributes {stable_mosaic.version = 11 : i64} {
  func.func @_fused_encoder_projector_kernel(%arg0: i32, %arg1: memref<16x128xf32, #tpu.memory_space<vmem>>, %arg2: memref<128x128xbf16, #tpu.memory_space<vmem>>, %arg3: memref<1x128xf32, #tpu.memory_space<vmem>>, %arg4: memref<128x128xbf16, #tpu.memory_space<vmem>>, %arg5: memref<1x128xf32, #tpu.memory_space<vmem>>, %arg6: memref<128x128xbf16, #tpu.memory_space<vmem>>, %arg7: memref<1x128xf32, #tpu.memory_space<vmem>>, %arg8: memref<128x128xbf16, #tpu.memory_space<vmem>>, %arg9: memref<1x128xf32, #tpu.memory_space<vmem>>, %arg10: memref<16x128xf32, #tpu.memory_space<vmem>>, %arg11: memref<16x128xf32, #tpu.memory_space<vmem>>, %arg12: memref<16x128xf32, #tpu.memory_space<vmem>>, %arg13: memref<16x128xf32, #tpu.memory_space<vmem>>) attributes {dimension_semantics = [#tpu.dimension_semantics<parallel>], iteration_bounds = array<i64: 1>, scalar_prefetch = 0 : i64, scratch_operands = 0 : i64, tpu.core_type = #tpu.core_type<tc>, window_params = [{transform_indices = @transform_0, window_bounds = array<i64: 16, 128>}, {pipeline_mode = #tpu.pipeline_mode<synchronous>, transform_indices = @transform_1, window_bounds = array<i64: 128, 128>}, {pipeline_mode = #tpu.pipeline_mode<synchronous>, transform_indices = @transform_2, window_bounds = array<i64: 1, 128>}, {pipeline_mode = #tpu.pipeline_mode<synchronous>, transform_indices = @transform_3, window_bounds = array<i64: 128, 128>}, {pipeline_mode = #tpu.pipeline_mode<synchronous>, transform_indices = @transform_4, window_bounds = array<i64: 1, 128>}, {pipeline_mode = #tpu.pipeline_mode<synchronous>, transform_indices = @transform_5, window_bounds = array<i64: 128, 128>}, {pipeline_mode = #tpu.pipeline_mode<synchronous>, transform_indices = @transform_6, window_bounds = array<i64: 1, 128>}, {pipeline_mode = #tpu.pipeline_mode<synchronous>, transform_indices = @transform_7, window_bounds = array<i64: 128, 128>}, {pipeline_mode = #tpu.pipeline_mode<synchronous>, transform_indices = @transform_8, window_bounds = array<i64: 1, 128>}, {transform_indices = @transform_9, window_bounds = array<i64: 16, 128>}, {transform_indices = @transform_10, window_bounds = array<i64: 16, 128>}, {transform_indices = @transform_11, window_bounds = array<i64: 16, 128>}, {transform_indices = @transform_12, window_bounds = array<i64: 16, 128>}]} {
    %c0 = arith.constant 0 : index
    %c0_0 = arith.constant 0 : index
    %0 = vector.load %arg1[%c0, %c0_0] : memref<16x128xf32, #tpu.memory_space<vmem>>, vector<16x128xf32>
    %1 = arith.truncf %0 : vector<16x128xf32> to vector<16x128xbf16>
    %c0_1 = arith.constant 0 : index
    %c0_2 = arith.constant 0 : index
    %2 = vector.load %arg2[%c0_1, %c0_2] : memref<128x128xbf16, #tpu.memory_space<vmem>>, vector<128x128xbf16>
    %cst = arith.constant dense<0.000000e+00> : vector<16x128xf32>
    %3 = tpu.matmul %1, %2, %cst {dimension_numbers = #tpu.dot_dimension_numbers<[1], [0], [0], [1], [0, 0, 1, 1], [], []>} : vector<16x128xbf16>, vector<128x128xbf16>, vector<16x128xf32> -> vector<16x128xf32>
    %c0_3 = arith.constant 0 : index
    %c0_4 = arith.constant 0 : index
    %4 = vector.load %arg3[%c0_3, %c0_4] : memref<1x128xf32, #tpu.memory_space<vmem>>, vector<1x128xf32>
    %5 = vector.broadcast %4 : vector<1x128xf32> to vector<16x128xf32>
    %6 = arith.addf %3, %5 : vector<16x128xf32>
    %cst_5 = arith.constant 0.000000e+00 : f32
    %7 = vector.broadcast %cst_5 : f32 to vector<16x128xf32>
    %8 = arith.maximumf %6, %7 : vector<16x128xf32>
    %c0_6 = arith.constant 0 : index
    %c0_7 = arith.constant 0 : index
    %9 = vector.load %arg10[%c0_6, %c0_7] : memref<16x128xf32, #tpu.memory_space<vmem>>, vector<16x128xf32>
    tpu.vector_store %arg10[%c0_6, %c0_7], %8 {strides = array<i32>} : memref<16x128xf32, #tpu.memory_space<vmem>>, vector<16x128xf32>,
    %10 = arith.truncf %8 : vector<16x128xf32> to vector<16x128xbf16>
    %c0_8 = arith.constant 0 : index
    %c0_9 = arith.constant 0 : index
    %11 = vector.load %arg6[%c0_8, %c0_9] : memref<128x128xbf16, #tpu.memory_space<vmem>>, vector<128x128xbf16>
    %cst_10 = arith.constant dense<0.000000e+00> : vector<16x128xf32>
    %12 = tpu.matmul %10, %11, %cst_10 {dimension_numbers = #tpu.dot_dimension_numbers<[1], [0], [0], [1], [0, 0, 1, 1], [], []>} : vector<16x128xbf16>, vector<128x128xbf16>, vector<16x128xf32> -> vector<16x128xf32>
    %c0_11 = arith.constant 0 : index
    %c0_12 = arith.constant 0 : index
    %13 = vector.load %arg7[%c0_11, %c0_12] : memref<1x128xf32, #tpu.memory_space<vmem>>, vector<1x128xf32>
    %14 = vector.broadcast %13 : vector<1x128xf32> to vector<16x128xf32>
    %15 = arith.addf %12, %14 : vector<16x128xf32>
    %cst_13 = arith.constant 0.000000e+00 : f32
    %16 = vector.broadcast %cst_13 : f32 to vector<16x128xf32>
    %17 = arith.maximumf %15, %16 : vector<16x128xf32>
    %c0_14 = arith.constant 0 : index
    %c0_15 = arith.constant 0 : index
    %18 = vector.load %arg12[%c0_14, %c0_15] : memref<16x128xf32, #tpu.memory_space<vmem>>, vector<16x128xf32>
    tpu.vector_store %arg12[%c0_14, %c0_15], %17 {strides = array<i32>} : memref<16x128xf32, #tpu.memory_space<vmem>>, vector<16x128xf32>,
    %c0_16 = arith.constant 0 : index
    %c0_17 = arith.constant 0 : index
    %19 = vector.load %arg4[%c0_16, %c0_17] : memref<128x128xbf16, #tpu.memory_space<vmem>>, vector<128x128xbf16>
    %cst_18 = arith.constant dense<0.000000e+00> : vector<16x128xf32>
    %20 = tpu.matmul %1, %19, %cst_18 {dimension_numbers = #tpu.dot_dimension_numbers<[1], [0], [0], [1], [0, 0, 1, 1], [], []>} : vector<16x128xbf16>, vector<128x128xbf16>, vector<16x128xf32> -> vector<16x128xf32>
    %c0_19 = arith.constant 0 : index
    %c0_20 = arith.constant 0 : index
    %21 = vector.load %arg5[%c0_19, %c0_20] : memref<1x128xf32, #tpu.memory_space<vmem>>, vector<1x128xf32>
    %22 = vector.broadcast %21 : vector<1x128xf32> to vector<16x128xf32>
    %23 = arith.addf %20, %22 : vector<16x128xf32>
    %cst_21 = arith.constant 0.000000e+00 : f32
    %24 = vector.broadcast %cst_21 : f32 to vector<16x128xf32>
    %25 = arith.maximumf %23, %24 : vector<16x128xf32>
    %c0_22 = arith.constant 0 : index
    %c0_23 = arith.constant 0 : index
    %26 = vector.load %arg11[%c0_22, %c0_23] : memref<16x128xf32, #tpu.memory_space<vmem>>, vector<16x128xf32>
    tpu.vector_store %arg11[%c0_22, %c0_23], %25 {strides = array<i32>} : memref<16x128xf32, #tpu.memory_space<vmem>>, vector<16x128xf32>,
    %27 = arith.truncf %25 : vector<16x128xf32> to vector<16x128xbf16>
    %c0_24 = arith.constant 0 : index
    %c0_25 = arith.constant 0 : index
    %28 = vector.load %arg8[%c0_24, %c0_25] : memref<128x128xbf16, #tpu.memory_space<vmem>>, vector<128x128xbf16>
    %cst_26 = arith.constant dense<0.000000e+00> : vector<16x128xf32>
    %29 = tpu.matmul %27, %28, %cst_26 {dimension_numbers = #tpu.dot_dimension_numbers<[1], [0], [0], [1], [0, 0, 1, 1], [], []>} : vector<16x128xbf16>, vector<128x128xbf16>, vector<16x128xf32> -> vector<16x128xf32>
    %c0_27 = arith.constant 0 : index
    %c0_28 = arith.constant 0 : index
    %30 = vector.load %arg9[%c0_27, %c0_28] : memref<1x128xf32, #tpu.memory_space<vmem>>, vector<1x128xf32>
    %31 = vector.broadcast %30 : vector<1x128xf32> to vector<16x128xf32>
    %32 = arith.addf %29, %31 : vector<16x128xf32>
    %cst_29 = arith.constant 0.000000e+00 : f32
    %33 = vector.broadcast %cst_29 : f32 to vector<16x128xf32>
    %34 = arith.maximumf %32, %33 : vector<16x128xf32>
    %c0_30 = arith.constant 0 : index
    %c0_31 = arith.constant 0 : index
    %35 = vector.load %arg13[%c0_30, %c0_31] : memref<16x128xf32, #tpu.memory_space<vmem>>, vector<16x128xf32>
    tpu.vector_store %arg13[%c0_30, %c0_31], %34 {strides = array<i32>} : memref<16x128xf32, #tpu.memory_space<vmem>>, vector<16x128xf32>,
    return
  }
  func.func @transform_0(%arg0: i32) -> (i32, i32) {
    %c0_i32 = arith.constant 0 : i32
    %c0_i32_0 = arith.constant 0 : i32
    return %arg0, %c0_i32 : i32, i32
  }
  func.func @transform_1(%arg0: i32) -> (i32, i32) {
    %c0_i32 = arith.constant 0 : i32
    %c0_i32_0 = arith.constant 0 : i32
    %c0_i32_1 = arith.constant 0 : i32
    return %c0_i32, %c0_i32_0 : i32, i32
  }
  func.func @transform_2(%arg0: i32) -> (i32, i32) {
    %c0_i32 = arith.constant 0 : i32
    %c0_i32_0 = arith.constant 0 : i32
    %c0_i32_1 = arith.constant 0 : i32
    return %c0_i32, %c0_i32_0 : i32, i32
  }
  func.func @transform_3(%arg0: i32) -> (i32, i32) {
    %c0_i32 = arith.constant 0 : i32
    %c0_i32_0 = arith.constant 0 : i32
    %c0_i32_1 = arith.constant 0 : i32
    return %c0_i32, %c0_i32_0 : i32, i32
  }
  func.func @transform_4(%arg0: i32) -> (i32, i32) {
    %c0_i32 = arith.constant 0 : i32
    %c0_i32_0 = arith.constant 0 : i32
    %c0_i32_1 = arith.constant 0 : i32
    return %c0_i32, %c0_i32_0 : i32, i32
  }
  func.func @transform_5(%arg0: i32) -> (i32, i32) {
    %c0_i32 = arith.constant 0 : i32
    %c0_i32_0 = arith.constant 0 : i32
    %c0_i32_1 = arith.constant 0 : i32
    return %c0_i32, %c0_i32_0 : i32, i32
  }
  func.func @transform_6(%arg0: i32) -> (i32, i32) {
    %c0_i32 = arith.constant 0 : i32
    %c0_i32_0 = arith.constant 0 : i32
    %c0_i32_1 = arith.constant 0 : i32
    return %c0_i32, %c0_i32_0 : i32, i32
  }
  func.func @transform_7(%arg0: i32) -> (i32, i32) {
    %c0_i32 = arith.constant 0 : i32
    %c0_i32_0 = arith.constant 0 : i32
    %c0_i32_1 = arith.constant 0 : i32
    return %c0_i32, %c0_i32_0 : i32, i32
  }
  func.func @transform_8(%arg0: i32) -> (i32, i32) {
    %c0_i32 = arith.constant 0 : i32
    %c0_i32_0 = arith.constant 0 : i32
    %c0_i32_1 = arith.constant 0 : i32
    return %c0_i32, %c0_i32_0 : i32, i32
  }
  func.func @transform_9(%arg0: i32) -> (i32, i32) {
    %c0_i32 = arith.constant 0 : i32
    %c0_i32_0 = arith.constant 0 : i32
    return %arg0, %c0_i32 : i32, i32
  }
  func.func @transform_10(%arg0: i32) -> (i32, i32) {
    %c0_i32 = arith.constant 0 : i32
    %c0_i32_0 = arith.constant 0 : i32
    return %arg0, %c0_i32 : i32, i32
  }
  func.func @transform_11(%arg0: i32) -> (i32, i32) {
    %c0_i32 = arith.constant 0 : i32
    %c0_i32_0 = arith.constant 0 : i32
    return %arg0, %c0_i32 : i32, i32
  }
  func.func @transform_12(%arg0: i32) -> (i32, i32) {
    %c0_i32 = arith.constant 0 : i32
    %c0_i32_0 = arith.constant 0 : i32
    return %arg0, %c0_i32 : i32, i32
  }
}

</mosaic_0001>

<llo_original>
// kernel: encoder_projector_forward.1
$region0: #{encoder_projector_forward.1}
  #allocation0 [shape = 'u32[]', space=smem, size = 0x4, offset = 0x4, fixed_abs, tag = 'smem constant byte address 0x4 - core index']
  #allocation1 [shape = 'u32[72,128]{1,0:T(1,128)}', space=vmem, size = 0x9000, scoped, tag = 'internal scratch']
  %s0 = inlined_call_operand.vmem [shape: f32[16,128], index: 0, kind: input, shape index: {}]
  %s1 = inlined_call_operand.hbm [shape: bf16[128,128], index: 1, kind: input, shape index: {}]
  %s2 = inlined_call_operand.vmem [shape: f32[1,128], index: 2, kind: input, shape index: {}]
  %s3 = inlined_call_operand.hbm [shape: bf16[128,128], index: 3, kind: input, shape index: {}]
  %s4 = inlined_call_operand.vmem [shape: f32[1,128], index: 4, kind: input, shape index: {}]
  %s5 = inlined_call_operand.hbm [shape: bf16[128,128], index: 5, kind: input, shape index: {}]
  %s6 = inlined_call_operand.vmem [shape: f32[1,128], index: 6, kind: input, shape index: {}]
  %s7 = inlined_call_operand.hbm [shape: bf16[128,128], index: 7, kind: input, shape index: {}]
  %s8 = inlined_call_operand.vmem [shape: f32[1,128], index: 8, kind: input, shape index: {}]
  %s9 = inlined_call_operand.vmem [shape: f32[16,128], index: 9, kind: output, shape index: {0}]
  %s10 = inlined_call_operand.vmem [shape: f32[16,128], index: 10, kind: output, shape index: {1}]
  %s11 = inlined_call_operand.hbm [shape: f32[16,128], index: 11, kind: output, shape index: {2}]
  %s12 = inlined_call_operand.hbm [shape: f32[16,128], index: 12, kind: output, shape index: {3}]
  %13 = xla_tuple %s9, %s10, %s11, %s12
  %s14 = sld [smem:[#allocation0]]
  $region86: #{encoder_projector_forward.1} parent=0
    _
  %s16 = ssub.s32 1, %s14
  %s17 = scalar_select 0, %s16, %s14
  $region1: #{encoder_projector_forward.1} parent=0
    #allocation2 [shape = 'u8[32768]{0}', space=vmem, size = 0x8000, scoped, tag = 'input window, operand 1, single buffered']
    #allocation3 [shape = 's32[1]{0}', space=sflag, size = 0x4, scoped, tag = 'scoped memory for encoder_projector_forward.1']
    #allocation4 [shape = 's32[1]{0}', space=sflag, size = 0x4, scoped, tag = 'scoped memory for encoder_projector_forward.1']
    #allocation5 [shape = 'u8[32768]{0}', space=vmem, size = 0x8000, scoped, tag = 'input window, operand 3, single buffered']
    #allocation6 [shape = 's32[1]{0}', space=sflag, size = 0x4, scoped, tag = 'scoped memory for encoder_projector_forward.1']
    #allocation7 [shape = 'u8[32768]{0}', space=vmem, size = 0x8000, scoped, tag = 'input window, operand 5, single buffered']
    #allocation8 [shape = 'u8[32768]{0}', space=vmem, size = 0x8000, scoped, tag = 'input window, operand 7, single buffered']
    #allocation9 [shape = 's32[1]{0}', space=sflag, size = 0x4, scoped, tag = 'scoped memory for encoder_projector_forward.1']
    #allocation10 [shape = 'u8[8192]{0}', space=vmem, size = 0x2000, scoped, tag = 'output window, operand 2, single buffered']
    #allocation11 [shape = 'u8[8192]{0}', space=vmem, size = 0x2000, scoped, tag = 'output window, operand 3, single buffered']
    #allocation12 [shape = 's32[1]{0}', space=sflag, size = 0x4, scoped, tag = 'scoped memory for encoder_projector_forward.1']
    %18 = vsyncpa [#allocation3], 0
    %19 = vsyncpa [#allocation6], 0
    %20 = vsyncpa [#allocation9], 0
    %21 = vsyncpa [#allocation4], 0
    %22 = vsyncpa [#allocation12], 0
    // Predicated region
    $region2: #{encoder_projector_forward.1} parent=1 // pred_check
      _
    $region3: #{encoder_projector_forward.1} parent=1 // pred_check_branch
      %24 = sbr.rel (0) target = $region5
    $region4: #{encoder_projector_forward.1} parent=1 // pred_region
      _
    $region5: #{encoder_projector_forward.1} parent=1 // pred_fallthru
      _
    // Predicated region
    $region6: #{encoder_projector_forward.1} parent=1 // pred_check
      _
    $region7: #{encoder_projector_forward.1} parent=1 // pred_check_branch
      %26 = sbr.rel (0) target = $region9
    $region8: #{encoder_projector_forward.1} parent=1 // pred_region
      %28 = vsyncadd [#allocation3], 0
      %s29 = sshll.u32 %s1, 4
      %s30 = int_to_ptr.hbm [resolvable:$true] %s29
      %s31 = sshll.u32 [#allocation2], 4
      %s32 = int_to_ptr.vmem [resolvable:$true] %s31
      %37 = dma.hbm_to_vmem [thread:$0]  %s30, 1024, %s32, [#allocation3], 64, 64, 4
    $region9: #{encoder_projector_forward.1} parent=1 // pred_fallthru
      _
    // Predicated region
    $region10: #{encoder_projector_forward.1} parent=1 // pred_check
      _
    $region11: #{encoder_projector_forward.1} parent=1 // pred_check_branch
      %39 = sbr.rel (0) target = $region13
    $region12: #{encoder_projector_forward.1} parent=1 // pred_region
      _
    $region13: #{encoder_projector_forward.1} parent=1 // pred_fallthru
      _
    // Predicated region
    $region14: #{encoder_projector_forward.1} parent=1 // pred_check
      _
    $region15: #{encoder_projector_forward.1} parent=1 // pred_check_branch
      %41 = sbr.rel (0) target = $region17
    $region16: #{encoder_projector_forward.1} parent=1 // pred_region
      %43 = vsyncadd [#allocation6], 0
      %s44 = sshll.u32 %s3, 4
      %s45 = int_to_ptr.hbm [resolvable:$true] %s44
      %s46 = sshll.u32 [#allocation5], 4
      %s47 = int_to_ptr.vmem [resolvable:$true] %s46
      %52 = dma.hbm_to_vmem [thread:$0]  %s45, 1024, %s47, [#allocation6], 64, 64, 4
    $region17: #{encoder_projector_forward.1} parent=1 // pred_fallthru
      _
    // Predicated region
    $region18: #{encoder_projector_forward.1} parent=1 // pred_check
      _
    $region19: #{encoder_projector_forward.1} parent=1 // pred_check_branch
      %54 = sbr.rel (0) target = $region21
    $region20: #{encoder_projector_forward.1} parent=1 // pred_region
      _
    $region21: #{encoder_projector_forward.1} parent=1 // pred_fallthru
      _
    // Predicated region
    $region22: #{encoder_projector_forward.1} parent=1 // pred_check
      _
    $region23: #{encoder_projector_forward.1} parent=1 // pred_check_branch
      %56 = sbr.rel (0) target = $region25
    $region24: #{encoder_projector_forward.1} parent=1 // pred_region
      %58 = vsyncadd [#allocation6], 0
      %s59 = sshll.u32 %s5, 4
      %s60 = int_to_ptr.hbm [resolvable:$true] %s59
      %s61 = sshll.u32 [#allocation7], 4
      %s62 = int_to_ptr.vmem [resolvable:$true] %s61
      %67 = dma.hbm_to_vmem [thread:$0]  %s60, 1024, %s62, [#allocation6], 64, 64, 4
    $region25: #{encoder_projector_forward.1} parent=1 // pred_fallthru
      _
    // Predicated region
    $region26: #{encoder_projector_forward.1} parent=1 // pred_check
      _
    $region27: #{encoder_projector_forward.1} parent=1 // pred_check_branch
      %69 = sbr.rel (0) target = $region29
    $region28: #{encoder_projector_forward.1} parent=1 // pred_region
      _
    $region29: #{encoder_projector_forward.1} parent=1 // pred_fallthru
      _
    // Predicated region
    $region30: #{encoder_projector_forward.1} parent=1 // pred_check
      _
    $region31: #{encoder_projector_forward.1} parent=1 // pred_check_branch
      %71 = sbr.rel (0) target = $region33
    $region32: #{encoder_projector_forward.1} parent=1 // pred_region
      %73 = vsyncadd [#allocation9], 0
      %s74 = sshll.u32 %s7, 4
      %s75 = int_to_ptr.hbm [resolvable:$true] %s74
      %s76 = sshll.u32 [#allocation8], 4
      %s77 = int_to_ptr.vmem [resolvable:$true] %s76
      %82 = dma.hbm_to_vmem [thread:$0]  %s75, 1024, %s77, [#allocation9], 64, 64, 4
    $region33: #{encoder_projector_forward.1} parent=1 // pred_fallthru
      _
    // Predicated region
    $region34: #{encoder_projector_forward.1} parent=1 // pred_check
      _
    $region35: #{encoder_projector_forward.1} parent=1 // pred_check_branch
      %84 = sbr.rel (0) target = $region37
    $region36: #{encoder_projector_forward.1} parent=1 // pred_region
      _
    $region37: #{encoder_projector_forward.1} parent=1 // pred_fallthru
      _
    // Predicated region
    $region38: #{encoder_projector_forward.1} parent=1 // pred_check
      _
    $region39: #{encoder_projector_forward.1} parent=1 // pred_check_branch
      %86 = sbr.rel (0) target = $region41
    $region40: #{encoder_projector_forward.1} parent=1 // pred_region
      %88 = dma.done [#allocation3], 1024
    $region41: #{encoder_projector_forward.1} parent=1 // pred_fallthru
      _
    // Predicated region
    $region42: #{encoder_projector_forward.1} parent=1 // pred_check
      _
    $region43: #{encoder_projector_forward.1} parent=1 // pred_check_branch
      %90 = sbr.rel (0) target = $region45
    $region44: #{encoder_projector_forward.1} parent=1 // pred_region
      %92 = dma.done [#allocation6], 1024
    $region45: #{encoder_projector_forward.1} parent=1 // pred_fallthru
      _
    // Predicated region
    $region46: #{encoder_projector_forward.1} parent=1 // pred_check
      _
    $region47: #{encoder_projector_forward.1} parent=1 // pred_check_branch
      %94 = sbr.rel (0) target = $region49
    $region48: #{encoder_projector_forward.1} parent=1 // pred_region
      %96 = dma.done [#allocation6], 1024
    $region49: #{encoder_projector_forward.1} parent=1 // pred_fallthru
      _
    // Predicated region
    $region50: #{encoder_projector_forward.1} parent=1 // pred_check
      _
    $region51: #{encoder_projector_forward.1} parent=1 // pred_check_branch
      %98 = sbr.rel (0) target = $region53
    $region52: #{encoder_projector_forward.1} parent=1 // pred_region
      %100 = dma.done [#allocation9], 1024
    $region53: #{encoder_projector_forward.1} parent=1 // pred_fallthru
      _
    %v101 = vld [vmem:[%s0] sm:$0xff]
    %v102 = vld [vmem:[%s0 + $0x8] sm:$0xff]
    %v103 = vpack.c.bf16 %v102, %v101
    %v104 = vld [vmem:[#allocation2] sm:$0xf]
    %v105 = vld [vmem:[#allocation2 + $0x4] sm:$0xf]
    %v106 = vld [vmem:[#allocation2 + $0x8] sm:$0xf]
    %v107 = vld [vmem:[#allocation2 + $0xc] sm:$0xf]
    %v108 = vld [vmem:[#allocation2 + $0x10] sm:$0xf]
    %v109 = vld [vmem:[#allocation2 + $0x14] sm:$0xf]
    %v110 = vld [vmem:[#allocation2 + $0x18] sm:$0xf]
    %v111 = vld [vmem:[#allocation2 + $0x1c] sm:$0xf]
    %v112 = vld [vmem:[#allocation2 + $0x20] sm:$0xf]
    %v113 = vld [vmem:[#allocation2 + $0x24] sm:$0xf]
    %v114 = vld [vmem:[#allocation2 + $0x28] sm:$0xf]
    %v115 = vld [vmem:[#allocation2 + $0x2c] sm:$0xf]
    %v116 = vld [vmem:[#allocation2 + $0x30] sm:$0xf]
    %v117 = vld [vmem:[#allocation2 + $0x34] sm:$0xf]
    %v118 = vld [vmem:[#allocation2 + $0x38] sm:$0xf]
    %v119 = vld [vmem:[#allocation2 + $0x3c] sm:$0xf]
    %v120 = vld [vmem:[%s2] sm:$0x1]
    %v122 = vperm.slane %v120, 0
    %v140 = vunpack.c.l.b16 %v104
    %v141 = vunpack.c.l.b16 %v105
    %v142 = vunpack.c.l.b16 %v106
    %v143 = vunpack.c.l.b16 %v107
    %v144 = vunpack.c.l.b16 %v108
    %v145 = vunpack.c.l.b16 %v109
    %v146 = vunpack.c.l.b16 %v110
    %v147 = vunpack.c.l.b16 %v111
    %v148 = vunpack.c.l.b16 %v112
    %v149 = vunpack.c.l.b16 %v113
    %v150 = vunpack.c.l.b16 %v114
    %v151 = vunpack.c.l.b16 %v115
    %v152 = vunpack.c.l.b16 %v116
    %v153 = vunpack.c.l.b16 %v117
    %v154 = vunpack.c.l.b16 %v118
    %v155 = vunpack.c.l.b16 %v119
    %v156 = vpack.c.b16 %v141, %v140
    %v157 = vpack.c.b16 %v143, %v142
    %v158 = vpack.c.b16 %v145, %v144
    %v159 = vpack.c.b16 %v147, %v146
    %v160 = vpack.c.b16 %v149, %v148
    %v161 = vpack.c.b16 %v151, %v150
    %v162 = vpack.c.b16 %v153, %v152
    %v163 = vpack.c.b16 %v155, %v154
    %172 = vmatpush.bf16.msra.mxu0 %v163
    %173 = vmatpush.bf16.msra.mxu0 %v162
    %174 = vmatpush.bf16.msra.mxu0 %v161
    %175 = vmatpush.bf16.msra.mxu0 %v160
    %176 = vmatpush.bf16.msra.mxu0 %v159
    %177 = vmatpush.bf16.msra.mxu0 %v158
    %178 = vmatpush.bf16.msra.mxu0 %v157
    %179 = vmatpush.bf16.msra.mxu0 %v156
    %180 = vmatmul.bf16.gmra.mxu0 %v103
    %v181 = vpop.f32.mrf.mxu0
    %v182 = vadd.f32 %v122, %v181
    %v183 = vpop.f32.mrf.mxu0
    %v184 = vadd.f32 %v122, %v183
    %185 = vdwg.mxu0
    %v186 = vmax.f32 %v182, 0.0
    %v187 = vmax.f32 %v184, 0.0
    %188 = vst [vmem:[%s9] sm:$0xff] %v186
    %189 = vst [vmem:[%s9 + $0x8] sm:$0xff] %v187
    %v190 = vpack.c.bf16 %v187, %v186
    %v191 = vld [vmem:[#allocation7] sm:$0xf]
    %v192 = vld [vmem:[#allocation7 + $0x4] sm:$0xf]
    %v193 = vld [vmem:[#allocation7 + $0x8] sm:$0xf]
    %v194 = vld [vmem:[#allocation7 + $0xc] sm:$0xf]
    %v195 = vld [vmem:[#allocation7 + $0x10] sm:$0xf]
    %v196 = vld [vmem:[#allocation7 + $0x14] sm:$0xf]
    %v197 = vld [vmem:[#allocation7 + $0x18] sm:$0xf]
    %v198 = vld [vmem:[#allocation7 + $0x1c] sm:$0xf]
    %v199 = vld [vmem:[#allocation7 + $0x20] sm:$0xf]
    %v200 = vld [vmem:[#allocation7 + $0x24] sm:$0xf]
    %v201 = vld [vmem:[#allocation7 + $0x28] sm:$0xf]
    %v202 = vld [vmem:[#allocation7 + $0x2c] sm:$0xf]
    %v203 = vld [vmem:[#allocation7 + $0x30] sm:$0xf]
    %v204 = vld [vmem:[#allocation7 + $0x34] sm:$0xf]
    %v205 = vld [vmem:[#allocation7 + $0x38] sm:$0xf]
    %v206 = vld [vmem:[#allocation7 + $0x3c] sm:$0xf]
    %v207 = vld [vmem:[%s6] sm:$0x1]
    %v209 = vperm.slane %v207, 0
    %v227 = vunpack.c.l.b16 %v191
    %v228 = vunpack.c.l.b16 %v192
    %v229 = vunpack.c.l.b16 %v193
    %v230 = vunpack.c.l.b16 %v194
    %v231 = vunpack.c.l.b16 %v195
    %v232 = vunpack.c.l.b16 %v196
    %v233 = vunpack.c.l.b16 %v197
    %v234 = vunpack.c.l.b16 %v198
    %v235 = vunpack.c.l.b16 %v199
    %v236 = vunpack.c.l.b16 %v200
    %v237 = vunpack.c.l.b16 %v201
    %v238 = vunpack.c.l.b16 %v202
    %v239 = vunpack.c.l.b16 %v203
    %v240 = vunpack.c.l.b16 %v204
    %v241 = vunpack.c.l.b16 %v205
    %v242 = vunpack.c.l.b16 %v206
    %v243 = vpack.c.b16 %v228, %v227
    %v244 = vpack.c.b16 %v230, %v229
    %v245 = vpack.c.b16 %v232, %v231
    %v246 = vpack.c.b16 %v234, %v233
    %v247 = vpack.c.b16 %v236, %v235
    %v248 = vpack.c.b16 %v238, %v237
    %v249 = vpack.c.b16 %v240, %v239
    %v250 = vpack.c.b16 %v242, %v241
    %259 = vmatpush.bf16.msra.mxu0 %v250
    %260 = vmatpush.bf16.msra.mxu0 %v249
    %261 = vmatpush.bf16.msra.mxu0 %v248
    %262 = vmatpush.bf16.msra.mxu0 %v247
    %263 = vmatpush.bf16.msra.mxu0 %v246
    %264 = vmatpush.bf16.msra.mxu0 %v245
    %265 = vmatpush.bf16.msra.mxu0 %v244
    %266 = vmatpush.bf16.msra.mxu0 %v243
    %267 = vmatmul.bf16.gmra.mxu0 %v190
    %v268 = vpop.f32.mrf.mxu0
    %v269 = vadd.f32 %v209, %v268
    %v270 = vpop.f32.mrf.mxu0
    %v271 = vadd.f32 %v209, %v270
    %272 = vdwg.mxu0
    %v273 = vmax.f32 %v269, 0.0
    %v274 = vmax.f32 %v271, 0.0
    %275 = vst [vmem:[#allocation10] sm:$0xff] %v273
    %276 = vst [vmem:[#allocation10 + $0x8] sm:$0xff] %v274
    %v277 = vld [vmem:[#allocation5] sm:$0xf]
    %v278 = vld [vmem:[#allocation5 + $0x4] sm:$0xf]
    %v279 = vld [vmem:[#allocation5 + $0x8] sm:$0xf]
    %v280 = vld [vmem:[#allocation5 + $0xc] sm:$0xf]
    %v281 = vld [vmem:[#allocation5 + $0x10] sm:$0xf]
    %v282 = vld [vmem:[#allocation5 + $0x14] sm:$0xf]
    %v283 = vld [vmem:[#allocation5 + $0x18] sm:$0xf]
    %v284 = vld [vmem:[#allocation5 + $0x1c] sm:$0xf]
    %v285 = vld [vmem:[#allocation5 + $0x20] sm:$0xf]
    %v286 = vld [vmem:[#allocation5 + $0x24] sm:$0xf]
    %v287 = vld [vmem:[#allocation5 + $0x28] sm:$0xf]
    %v288 = vld [vmem:[#allocation5 + $0x2c] sm:$0xf]
    %v289 = vld [vmem:[#allocation5 + $0x30] sm:$0xf]
    %v290 = vld [vmem:[#allocation5 + $0x34] sm:$0xf]
    %v291 = vld [vmem:[#allocation5 + $0x38] sm:$0xf]
    %v292 = vld [vmem:[#allocation5 + $0x3c] sm:$0xf]
    %v293 = vld [vmem:[%s4] sm:$0x1]
    %v295 = vperm.slane %v293, 0
    %v313 = vunpack.c.l.b16 %v277
    %v314 = vunpack.c.l.b16 %v278
    %v315 = vunpack.c.l.b16 %v279
    %v316 = vunpack.c.l.b16 %v280
    %v317 = vunpack.c.l.b16 %v281
    %v318 = vunpack.c.l.b16 %v282
    %v319 = vunpack.c.l.b16 %v283
    %v320 = vunpack.c.l.b16 %v284
    %v321 = vunpack.c.l.b16 %v285
    %v322 = vunpack.c.l.b16 %v286
    %v323 = vunpack.c.l.b16 %v287
    %v324 = vunpack.c.l.b16 %v288
    %v325 = vunpack.c.l.b16 %v289
    %v326 = vunpack.c.l.b16 %v290
    %v327 = vunpack.c.l.b16 %v291
    %v328 = vunpack.c.l.b16 %v292
    %v329 = vpack.c.b16 %v314, %v313
    %v330 = vpack.c.b16 %v316, %v315
    %v331 = vpack.c.b16 %v318, %v317
    %v332 = vpack.c.b16 %v320, %v319
    %v333 = vpack.c.b16 %v322, %v321
    %v334 = vpack.c.b16 %v324, %v323
    %v335 = vpack.c.b16 %v326, %v325
    %v336 = vpack.c.b16 %v328, %v327
    %345 = vmatpush.bf16.msra.mxu0 %v336
    %346 = vmatpush.bf16.msra.mxu0 %v335
    %347 = vmatpush.bf16.msra.mxu0 %v334
    %348 = vmatpush.bf16.msra.mxu0 %v333
    %349 = vmatpush.bf16.msra.mxu0 %v332
    %350 = vmatpush.bf16.msra.mxu0 %v331
    %351 = vmatpush.bf16.msra.mxu0 %v330
    %352 = vmatpush.bf16.msra.mxu0 %v329
    %353 = vmatmul.bf16.gmra.mxu0 %v103
    %v354 = vpop.f32.mrf.mxu0
    %v355 = vadd.f32 %v295, %v354
    %v356 = vpop.f32.mrf.mxu0
    %v357 = vadd.f32 %v295, %v356
    %358 = vdwg.mxu0
    %v359 = vmax.f32 %v355, 0.0
    %v360 = vmax.f32 %v357, 0.0
    %361 = vst [vmem:[%s10] sm:$0xff] %v359
    %362 = vst [vmem:[%s10 + $0x8] sm:$0xff] %v360
    %v363 = vpack.c.bf16 %v360, %v359
    %v364 = vld [vmem:[#allocation8] sm:$0xf]
    %v365 = vld [vmem:[#allocation8 + $0x4] sm:$0xf]
    %v366 = vld [vmem:[#allocation8 + $0x8] sm:$0xf]
    %v367 = vld [vmem:[#allocation8 + $0xc] sm:$0xf]
    %v368 = vld [vmem:[#allocation8 + $0x10] sm:$0xf]
    %v369 = vld [vmem:[#allocation8 + $0x14] sm:$0xf]
    %v370 = vld [vmem:[#allocation8 + $0x18] sm:$0xf]
    %v371 = vld [vmem:[#allocation8 + $0x1c] sm:$0xf]
    %v372 = vld [vmem:[#allocation8 + $0x20] sm:$0xf]
    %v373 = vld [vmem:[#allocation8 + $0x24] sm:$0xf]
    %v374 = vld [vmem:[#allocation8 + $0x28] sm:$0xf]
    %v375 = vld [vmem:[#allocation8 + $0x2c] sm:$0xf]
    %v376 = vld [vmem:[#allocation8 + $0x30] sm:$0xf]
    %v377 = vld [vmem:[#allocation8 + $0x34] sm:$0xf]
    %v378 = vld [vmem:[#allocation8 + $0x38] sm:$0xf]
    %v379 = vld [vmem:[#allocation8 + $0x3c] sm:$0xf]
    %v380 = vld [vmem:[%s8] sm:$0x1]
    %v382 = vperm.slane %v380, 0
    %v400 = vunpack.c.l.b16 %v364
    %v401 = vunpack.c.l.b16 %v365
    %v402 = vunpack.c.l.b16 %v366
    %v403 = vunpack.c.l.b16 %v367
    %v404 = vunpack.c.l.b16 %v368
    %v405 = vunpack.c.l.b16 %v369
    %v406 = vunpack.c.l.b16 %v370
    %v407 = vunpack.c.l.b16 %v371
    %v408 = vunpack.c.l.b16 %v372
    %v409 = vunpack.c.l.b16 %v373
    %v410 = vunpack.c.l.b16 %v374
    %v411 = vunpack.c.l.b16 %v375
    %v412 = vunpack.c.l.b16 %v376
    %v413 = vunpack.c.l.b16 %v377
    %v414 = vunpack.c.l.b16 %v378
    %v415 = vunpack.c.l.b16 %v379
    %v416 = vpack.c.b16 %v401, %v400
    %v417 = vpack.c.b16 %v403, %v402
    %v418 = vpack.c.b16 %v405, %v404
    %v419 = vpack.c.b16 %v407, %v406
    %v420 = vpack.c.b16 %v409, %v408
    %v421 = vpack.c.b16 %v411, %v410
    %v422 = vpack.c.b16 %v413, %v412
    %v423 = vpack.c.b16 %v415, %v414
    %432 = vmatpush.bf16.msra.mxu0 %v423
    %433 = vmatpush.bf16.msra.mxu0 %v422
    %434 = vmatpush.bf16.msra.mxu0 %v421
    %435 = vmatpush.bf16.msra.mxu0 %v420
    %436 = vmatpush.bf16.msra.mxu0 %v419
    %437 = vmatpush.bf16.msra.mxu0 %v418
    %438 = vmatpush.bf16.msra.mxu0 %v417
    %439 = vmatpush.bf16.msra.mxu0 %v416
    %440 = vmatmul.bf16.gmra.mxu0 %v363
    %v441 = vpop.f32.mrf.mxu0
    %v442 = vadd.f32 %v382, %v441
    %v443 = vpop.f32.mrf.mxu0
    %v444 = vadd.f32 %v382, %v443
    %445 = vdwg.mxu0
    %v446 = vmax.f32 %v442, 0.0
    %v447 = vmax.f32 %v444, 0.0
    %448 = vst [vmem:[#allocation11] sm:$0xff] %v446
    %449 = vst [vmem:[#allocation11 + $0x8] sm:$0xff] %v447
    // Predicated region
    $region54: #{encoder_projector_forward.1} parent=1 // pred_check
      _
    $region55: #{encoder_projector_forward.1} parent=1 // pred_check_branch
      %451 = sbr.rel (0) target = $region57
    $region56: #{encoder_projector_forward.1} parent=1 // pred_region
      _
    $region57: #{encoder_projector_forward.1} parent=1 // pred_fallthru
      _
    // Predicated region
    $region58: #{encoder_projector_forward.1} parent=1 // pred_check
      _
    $region59: #{encoder_projector_forward.1} parent=1 // pred_check_branch
      %453 = sbr.rel (0) target = $region61
    $region60: #{encoder_projector_forward.1} parent=1 // pred_region
      _
    $region61: #{encoder_projector_forward.1} parent=1 // pred_fallthru
      _
    // Predicated region
    $region62: #{encoder_projector_forward.1} parent=1 // pred_check
      _
    $region63: #{encoder_projector_forward.1} parent=1 // pred_check_branch
      %455 = sbr.rel (0) target = $region65
    $region64: #{encoder_projector_forward.1} parent=1 // pred_region
      %457 = vsyncadd [#allocation4], 0
      %s458 = sshll.u32 [#allocation10], 4
      %s459 = int_to_ptr.vmem [resolvable:$true] %s458
      %s460 = sshll.u32 %s11, 4
      %s461 = int_to_ptr.hbm [resolvable:$true] %s460
      %466 = dma.vmem_to_hbm [thread:$0]  %s459, 256, %s461, [#allocation4], 128, 128, 8
    $region65: #{encoder_projector_forward.1} parent=1 // pred_fallthru
      _
    // Predicated region
    $region66: #{encoder_projector_forward.1} parent=1 // pred_check
      _
    $region67: #{encoder_projector_forward.1} parent=1 // pred_check_branch
      %468 = sbr.rel (0) target = $region69
    $region68: #{encoder_projector_forward.1} parent=1 // pred_region
      %470 = vsyncadd [#allocation12], 0
      %s471 = sshll.u32 [#allocation11], 4
      %s472 = int_to_ptr.vmem [resolvable:$true] %s471
      %s473 = sshll.u32 %s12, 4
      %s474 = int_to_ptr.hbm [resolvable:$true] %s473
      %479 = dma.vmem_to_hbm [thread:$0]  %s472, 256, %s474, [#allocation12], 128, 128, 8
    $region69: #{encoder_projector_forward.1} parent=1 // pred_fallthru
      _
    // Predicated region
    $region70: #{encoder_projector_forward.1} parent=1 // pred_check
      _
    $region71: #{encoder_projector_forward.1} parent=1 // pred_check_branch
      %481 = sbr.rel (0) target = $region73
    $region72: #{encoder_projector_forward.1} parent=1 // pred_region
      _
    $region73: #{encoder_projector_forward.1} parent=1 // pred_fallthru
      _
    // Predicated region
    $region74: #{encoder_projector_forward.1} parent=1 // pred_check
      _
    $region75: #{encoder_projector_forward.1} parent=1 // pred_check_branch
      %483 = sbr.rel (0) target = $region77
    $region76: #{encoder_projector_forward.1} parent=1 // pred_region
      _
    $region77: #{encoder_projector_forward.1} parent=1 // pred_fallthru
      _
    // Predicated region
    $region78: #{encoder_projector_forward.1} parent=1 // pred_check
      _
    $region79: #{encoder_projector_forward.1} parent=1 // pred_check_branch
      %485 = sbr.rel (0) target = $region81
    $region80: #{encoder_projector_forward.1} parent=1 // pred_region
      %487 = dma.done [#allocation4], 256
    $region81: #{encoder_projector_forward.1} parent=1 // pred_fallthru
      _
    // Predicated region
    $region82: #{encoder_projector_forward.1} parent=1 // pred_check
      _
    $region83: #{encoder_projector_forward.1} parent=1 // pred_check_branch
      %489 = sbr.rel (0) target = $region85
    $region84: #{encoder_projector_forward.1} parent=1 // pred_region
      %491 = dma.done [#allocation12], 256
    $region85: #{encoder_projector_forward.1} parent=1 // pred_fallthru
      _
    %492 = vsyncpa [#allocation3], 1
    %493 = vsyncpa [#allocation6], 1
    %494 = vsyncpa [#allocation9], 1
    %495 = vsyncpa [#allocation4], 1
    %496 = vsyncpa [#allocation12], 1

</llo_original>
